<compile_context>
chip_gen: v6e
topology: v6e:2x2x1
jax: 0.10.0
libtpu: 0.0.40
codegen_flags: <defaults>
</compile_context>

<pallas_src>
import functools

import jax
import jax.numpy as jnp
from jax.experimental import pallas as pl
from jax.experimental.pallas import tpu as pltpu


def _round_up(v, m):
    return (v + m - 1) // m * m


def _cdiv(a, b):
    return -(-a // b)


def _vmem_capacity_bytes():
    try:
        return int(pltpu.get_tpu_info().vmem_capacity_bytes)
    except Exception:
        return 64 * 1024 * 1024  # conservative: v7x per-TensorCore VMEM


def _vmem_budgets():
    """(streaming budget, vmem_limit_bytes) by TPU generation."""
    cap = _vmem_capacity_bytes()
    if cap >= 128 * 1024 * 1024:          # v5e / v6e
        return 88 * 1024 * 1024, 104 * 1024 * 1024
    return 26 * 1024 * 1024, 48 * 1024 * 1024  # v7x (64 MiB VMEM per TC)


# ----------------------------------------------------------------------------
# One-time parameter preparation (init-time, NOT in the per-call hot path).
# ----------------------------------------------------------------------------
def prepare_linear_block_params(weight, bias, gamma, beta, running_mean,
                                running_var, *, bn_eps=1e-5, stream_dtype=None,
                                tk=2048):
    """Precompute W^T (padded along K) and fold bias + eval-mode BN.

    weight: (out_size, in_size) -- torch nn.Linear layout
    stream_dtype: dtype the weight is streamed in (e.g. jnp.bfloat16 to halve
        HBM weight traffic); accumulation stays in f32 regardless.
    """
    N, D = weight.shape
    stream_dtype = weight.dtype if stream_dtype is None else stream_dtype

    # Fold:  (x@W.T + b - mean) * gamma * rsqrt(var+eps) + beta
    #      = (x@W.T) * scale + shift
    scale = gamma.astype(jnp.float32) * jax.lax.rsqrt(
        running_var.astype(jnp.float32) + float(bn_eps))
    shift = beta.astype(jnp.float32) + (
        bias.astype(jnp.float32) - running_mean.astype(jnp.float32)) * scale

    # --- K tiling: big tiles, VMEM-capped, minimal over-padding of D ---------
    budget, _ = _vmem_budgets()
    w_bytes = jnp.dtype(stream_dtype).itemsize
    x_bytes = 4          # assume <= f32 activations for the budget math
    tb_max = 512
    per_k = 2 * (tb_max * x_bytes + N * w_bytes)     # double-buffered streams
    tk_cap = max(128, (budget // per_k) // 128 * 128)

    d128 = _round_up(D, 128)
    tk_eff = min(_round_up(max(int(tk), 128), 128), tk_cap, d128)
    n_k = _cdiv(d128, tk_eff)
    tk_eff = _round_up(_cdiv(d128, n_k), 128)
    d_pad = n_k * tk_eff

    w_t = jnp.pad(weight.T.astype(stream_dtype), ((0, d_pad - D), (0, 0)))

    return {
        "w_t": w_t,                       # (D_pad, N) pre-transposed, padded
        "scale": scale.reshape(1, N),
        "shift": shift.reshape(1, N),
        "tk": int(tk_eff),
        "in_size": int(D),
    }


# ----------------------------------------------------------------------------
# Kernel: tiled matmul over K with fused scale/shift (bias+BN) + LeakyReLU.
# Grid = (B_blocks [parallel], K_blocks [arbitrary]); f32 VMEM accumulator,
# HBM output written once per batch block at the final K step.
# ----------------------------------------------------------------------------
def _linear_block_kernel(x_ref, w_ref, scale_ref, shift_ref, out_ref, acc_ref,
                         *, negative_slope):
    k = pl.program_id(1)

    @pl.when(k == 0)
    def _():
        acc_ref[...] = jnp.zeros_like(acc_ref)

    acc_ref[...] += jnp.dot(x_ref[...], w_ref[...],
                            preferred_element_type=jnp.float32)

    @pl.when(k == pl.num_programs(1) - 1)
    def _():
        y = acc_ref[...] * scale_ref[...] + shift_ref[...]
        out_ref[...] = jnp.where(y >= 0, y, negative_slope * y).astype(out_ref.dtype)


@functools.partial(jax.jit, static_argnames=("tk", "negative_slope"))
def linear_block_forward(x, w_t, scale, shift, *, tk, negative_slope=0.2):
    """linear_block forward (eval-mode BN) using prepared params.

    x:     (B, in_size)
    w_t:   (D_pad, out_size)  -- from prepare_linear_block_params
    scale, shift: (1, out_size)
    """
    assert x.ndim == 2, "linear_block expects (batch, features) input"
    B, D = x.shape
    d_pad, N = w_t.shape
    assert d_pad % tk == 0 and d_pad >= D
    n_k = d_pad // tk

    budget, vmem_limit = _vmem_budgets()
    x_bytes = jnp.dtype(x.dtype).itemsize
    w_bytes = jnp.dtype(w_t.dtype).itemsize

    # --- batch tiling: as large as the stream budget allows (weight reuse) ---
    stream_w = 2 * tk * N * w_bytes
    avail = budget - stream_w - 2 * N * 4
    per_row = 2 * tk * x_bytes + N * 4            # x stream + acc/out
    tb_cap = max(8, (max(avail, 0) // max(per_row, 1)) // 8 * 8)
    tb = max(8, min(_round_up(B, 8), 512, tb_cap))
    b_pad = _round_up(B, tb)

    if b_pad != B or d_pad != D:
        x_p = jnp.pad(x, ((0, b_pad - B), (0, d_pad - D)))
    else:
        x_p = x

    grid = (b_pad // tb, n_k)

    kernel = functools.partial(_linear_block_kernel,
                               negative_slope=float(negative_slope))

    grid_spec = pltpu.PrefetchScalarGridSpec(
        num_scalar_prefetch=0,
        grid=grid,
        in_specs=[
            pl.BlockSpec((tb, tk), lambda bi, ki: (bi, ki)),   # x chunk
            pl.BlockSpec((tk, N), lambda bi, ki: (ki, 0)),     # W^T chunk
            pl.BlockSpec((1, N), lambda bi, ki: (0, 0)),       # folded scale
            pl.BlockSpec((1, N), lambda bi, ki: (0, 0)),       # folded shift
        ],
        out_specs=pl.BlockSpec((tb, N), lambda bi, ki: (bi, 0)),
        scratch_shapes=[pltpu.VMEM((tb, N), jnp.float32)],
    )

    # Bytes include the weight re-stream for every batch block (no reuse of
    # W^T tiles across the parallel batch axis).
    n_bblocks = b_pad // tb
    cost = pl.CostEstimate(
        flops=2 * b_pad * d_pad * N + 4 * b_pad * N,
        bytes_accessed=(b_pad * d_pad * x_bytes
                        + n_bblocks * d_pad * N * w_bytes
                        + b_pad * N * 4 + 2 * N * 4),
        transcendentals=0,
    )

    out = pl.pallas_call(
        kernel,
        out_shape=jax.ShapeDtypeStruct((b_pad, N), jnp.float32),
        grid_spec=grid_spec,
        compiler_params=pltpu.CompilerParams(
            dimension_semantics=("parallel", "arbitrary"),
            vmem_limit_bytes=vmem_limit),
        cost_estimate=cost,
    )(x_p, w_t, scale, shift)

    return out[:B]


def _reference(x, weight, bias, gamma, beta, mean, var, eps=1e-5, slope=0.2):
    y = x @ weight.T + bias
    y = (y - mean) / jnp.sqrt(var + eps) * gamma + beta
    return jnp.where(y >= 0, y, slope * y)


if __name__ == "__main__":
    # Small shapes consistent with the module; in_size deliberately NOT a
    # multiple of 128 and batch NOT a multiple of 8 to exercise padding.
    B, IN, OUT = 6, 300, 64

    key = jax.random.PRNGKey(0)
    k_x, k_w, k_b, k_g, k_be, k_m, k_v = jax.random.split(key, 7)

    x = jax.random.normal(k_x, (B, IN), dtype=jnp.float32)

    # nn.Linear-style init: U(-1/sqrt(in_size), 1/sqrt(in_size)).
    bound = 1.0 / (IN ** 0.5)
    weight = jax.random.uniform(k_w, (OUT, IN), jnp.float32, -bound, bound)
    bias = jax.random.uniform(k_b, (OUT,), jnp.float32, -bound, bound)

    # BatchNorm1d parameters / running stats (eval-mode forward).
    gamma = 1.0 + 0.1 * jax.random.normal(k_g, (OUT,), jnp.float32)
    beta = 0.1 * jax.random.normal(k_be, (OUT,), jnp.float32)
    running_mean = 0.1 * jax.random.normal(k_m, (OUT,), jnp.float32)
    running_var = jax.random.uniform(k_v, (OUT,), jnp.float32, 0.5, 1.5)

    # One-time (init) preparation: W^T + K-pad + folded BN/bias.
    # (Pass stream_dtype=jnp.bfloat16 to halve weight HBM traffic.)
    params = prepare_linear_block_params(weight, bias, gamma, beta,
                                         running_mean, running_var,
                                         bn_eps=1e-5)

    out = linear_block_forward(x, params["w_t"], params["scale"],
                               params["shift"], tk=params["tk"],
                               negative_slope=0.2)
    jax.block_until_ready(out)

    ref = _reference(x, weight, bias, gamma, beta, running_mean, running_var)
    assert out.shape == (B, OUT)
    assert jnp.allclose(out, ref, atol=1e-4, rtol=1e-4), "mismatch vs reference"

    print("KERNEL_OK")
</pallas_src>

<mosaic_0001>
module attributes {stable_mosaic.version = 11 : i64} {
  func.func @_linear_block_kernel(%arg0: i32, %arg1: i32, %arg2: memref<8x384xf32, #tpu.memory_space<vmem>>, %arg3: memref<384x64xf32, #tpu.memory_space<vmem>>, %arg4: memref<1x64xf32, #tpu.memory_space<vmem>>, %arg5: memref<1x64xf32, #tpu.memory_space<vmem>>, %arg6: memref<8x64xf32, #tpu.memory_space<vmem>>, %arg7: memref<8x64xf32, #tpu.memory_space<vmem>>) attributes {dimension_semantics = [#tpu.dimension_semantics<parallel>, #tpu.dimension_semantics<arbitrary>], iteration_bounds = array<i64: 1, 1>, scalar_prefetch = 0 : i64, scratch_operands = 1 : i64, tpu.core_type = #tpu.core_type<tc>, window_params = [{transform_indices = @transform_0, window_bounds = array<i64: 8, 384>}, {transform_indices = @transform_1, window_bounds = array<i64: 384, 64>}, {pipeline_mode = #tpu.pipeline_mode<synchronous>, transform_indices = @transform_2, window_bounds = array<i64: 1, 64>}, {pipeline_mode = #tpu.pipeline_mode<synchronous>, transform_indices = @transform_3, window_bounds = array<i64: 1, 64>}, {transform_indices = @transform_4, window_bounds = array<i64: 8, 64>}]} {
    %c0_i32 = arith.constant 0 : i32
    %0 = arith.cmpi eq, %arg1, %c0_i32 : i32
    %1 = arith.extui %0 : i1 to i32
    %c0_i32_0 = arith.constant 0 : i32
    %2 = arith.cmpi ne, %1, %c0_i32_0 : i32
    scf.if %2 {
      %cst_10 = arith.constant 0.000000e+00 : f32
      %12 = vector.broadcast %cst_10 : f32 to vector<8x64xf32>
      %c0_11 = arith.constant 0 : index
      %c0_12 = arith.constant 0 : index
      %13 = vector.load %arg7[%c0_11, %c0_12] : memref<8x64xf32, #tpu.memory_space<vmem>>, vector<8x64xf32>
      tpu.vector_store %arg7[%c0_11, %c0_12], %12 {strides = array<i32>} : memref<8x64xf32, #tpu.memory_space<vmem>>, vector<8x64xf32>,
    } else {
    }
    %c0 = arith.constant 0 : index
    %c0_1 = arith.constant 0 : index
    %3 = vector.load %arg7[%c0, %c0_1] : memref<8x64xf32, #tpu.memory_space<vmem>>, vector<8x64xf32>
    %c0_2 = arith.constant 0 : index
    %c0_3 = arith.constant 0 : index
    %4 = vector.load %arg2[%c0_2, %c0_3] : memref<8x384xf32, #tpu.memory_space<vmem>>, vector<8x384xf32>
    %c0_4 = arith.constant 0 : index
    %c0_5 = arith.constant 0 : index
    %5 = vector.load %arg3[%c0_4, %c0_5] : memref<384x64xf32, #tpu.memory_space<vmem>>, vector<384x64xf32>
    %cst = arith.constant dense<0.000000e+00> : vector<8x64xf32>
    %6 = tpu.matmul %4, %5, %cst {dimension_numbers = #tpu.dot_dimension_numbers<[1], [0], [0], [1], [0, 0, 1, 1], [], []>} : vector<8x384xf32>, vector<384x64xf32>, vector<8x64xf32> -> vector<8x64xf32>
    %7 = arith.addf %3, %6 : vector<8x64xf32>
    %c0_6 = arith.constant 0 : index
    %c0_7 = arith.constant 0 : index
    %8 = vector.load %arg7[%c0_6, %c0_7] : memref<8x64xf32, #tpu.memory_space<vmem>>, vector<8x64xf32>
    tpu.vector_store %arg7[%c0_6, %c0_7], %7 {strides = array<i32>} : memref<8x64xf32, #tpu.memory_space<vmem>>, vector<8x64xf32>,
    %c0_i32_8 = arith.constant 0 : i32
    %9 = arith.cmpi eq, %arg1, %c0_i32_8 : i32
    %10 = arith.extui %9 : i1 to i32
    %c0_i32_9 = arith.constant 0 : i32
    %11 = arith.cmpi ne, %10, %c0_i32_9 : i32
    scf.if %11 {
      %c0_10 = arith.constant 0 : index
      %c0_11 = arith.constant 0 : index
      %12 = vector.load %arg7[%c0_10, %c0_11] : memref<8x64xf32, #tpu.memory_space<vmem>>, vector<8x64xf32>
      %c0_12 = arith.constant 0 : index
      %c0_13 = arith.constant 0 : index
      %13 = vector.load %arg4[%c0_12, %c0_13] : memref<1x64xf32, #tpu.memory_space<vmem>>, vector<1x64xf32>
      %14 = vector.broadcast %13 : vector<1x64xf32> to vector<8x64xf32>
      %15 = arith.mulf %12, %14 : vector<8x64xf32>
      %c0_14 = arith.constant 0 : index
      %c0_15 = arith.constant 0 : index
      %16 = vector.load %arg5[%c0_14, %c0_15] : memref<1x64xf32, #tpu.memory_space<vmem>>, vector<1x64xf32>
      %17 = vector.broadcast %16 : vector<1x64xf32> to vector<8x64xf32>
      %18 = arith.addf %15, %17 : vector<8x64xf32>
      %cst_16 = arith.constant 0.000000e+00 : f32
      %19 = vector.broadcast %cst_16 : f32 to vector<8x64xf32>
      %20 = arith.cmpf oge, %18, %19 : vector<8x64xf32>
      %cst_17 = arith.constant 2.000000e-01 : f32
      %21 = vector.broadcast %cst_17 : f32 to vector<8x64xf32>
      %22 = arith.mulf %21, %18 : vector<8x64xf32>
      %23 = arith.select %20, %18, %22 : vector<8x64xi1>, vector<8x64xf32>
      %c0_18 = arith.constant 0 : index
      %c0_19 = arith.constant 0 : index
      %24 = vector.load %arg6[%c0_18, %c0_19] : memref<8x64xf32, #tpu.memory_space<vmem>>, vector<8x64xf32>
      tpu.vector_store %arg6[%c0_18, %c0_19], %23 {strides = array<i32>} : memref<8x64xf32, #tpu.memory_space<vmem>>, vector<8x64xf32>,
    } else {
    }
    return
  }
  func.func @transform_0(%arg0: i32, %arg1: i32) -> (i32, i32) {
    %c0_i32 = arith.constant 0 : i32
    return %arg0, %arg1 : i32, i32
  }
  func.func @transform_1(%arg0: i32, %arg1: i32) -> (i32, i32) {
    %c0_i32 = arith.constant 0 : i32
    %c0_i32_0 = arith.constant 0 : i32
    return %arg1, %c0_i32 : i32, i32
  }
  func.func @transform_2(%arg0: i32, %arg1: i32) -> (i32, i32) {
    %c0_i32 = arith.constant 0 : i32
    %c0_i32_0 = arith.constant 0 : i32
    %c0_i32_1 = arith.constant 0 : i32
    return %c0_i32, %c0_i32_0 : i32, i32
  }
  func.func @transform_3(%arg0: i32, %arg1: i32) -> (i32, i32) {
    %c0_i32 = arith.constant 0 : i32
    %c0_i32_0 = arith.constant 0 : i32
    %c0_i32_1 = arith.constant 0 : i32
    return %c0_i32, %c0_i32_0 : i32, i32
  }
  func.func @transform_4(%arg0: i32, %arg1: i32) -> (i32, i32) {
    %c0_i32 = arith.constant 0 : i32
    %c0_i32_0 = arith.constant 0 : i32
    return %arg0, %c0_i32 : i32, i32
  }
}

</mosaic_0001>

<llo_original>
// kernel: linear_block_forward.1
$region0: #{linear_block_forward.1}
  #allocation0 [shape = 'u32[]', space=smem, size = 0x4, offset = 0x4, fixed_abs, tag = 'smem constant byte address 0x4 - core index']
  #allocation1 [shape = 'u32[144,128]{1,0:T(1,128)}', space=vmem, size = 0x12000, scoped, tag = 'internal scratch']
  #allocation2 [shape = 'f32[8,64]{1,0:T(8,128)}', space=vmem, size = 0x1000, scoped, tag = 'scratch operand']
  %s0 = inlined_call_operand.vmem [shape: f32[8,384], index: 0, kind: input, shape index: {}]
  %s1 = inlined_call_operand.vmem [shape: f32[384,64], index: 1, kind: input, shape index: {}]
  %s2 = inlined_call_operand.vmem [shape: f32[1,64], index: 2, kind: input, shape index: {}]
  %s3 = inlined_call_operand.vmem [shape: f32[1,64], index: 3, kind: input, shape index: {}]
  %s4 = inlined_call_operand.hbm [shape: f32[8,64], index: 4, kind: output, shape index: {}]
  %s5 = sld [smem:[#allocation0]]
  $region34: #{linear_block_forward.1} parent=0
    _
  %s7 = ssub.s32 1, %s5
  %s8 = scalar_select 0, %s7, %s5
  $region1: #{linear_block_forward.1} parent=0
    #allocation3 [shape = 'u8[4096]{0}', space=vmem, size = 0x1000, scoped, tag = 'output window, operand 0, single buffered']
    #allocation4 [shape = 's32[1]{0}', space=sflag, size = 0x4, scoped, tag = 'scoped memory for linear_block_forward.1']
    %9 = vsyncpa [#allocation4], 0
    // Predicated region
    $region2: #{linear_block_forward.1} parent=1 // pred_check
      _
    $region3: #{linear_block_forward.1} parent=1 // pred_check_branch
      %11 = sbr.rel (0) target = $region5
    $region4: #{linear_block_forward.1} parent=1 // pred_region
      _
    $region5: #{linear_block_forward.1} parent=1 // pred_fallthru
      _
    // Predicated region
    $region6: #{linear_block_forward.1} parent=1 // pred_check
      _
    $region7: #{linear_block_forward.1} parent=1 // pred_check_branch
      %13 = sbr.rel (0) target = $region9
    $region8: #{linear_block_forward.1} parent=1 // pred_region
      _
    $region9: #{linear_block_forward.1} parent=1 // pred_fallthru
      _
    // Predicated region
    $region10: #{linear_block_forward.1} parent=1 // pred_check
      _
    $region11: #{linear_block_forward.1} parent=1 // pred_check_branch
      %15 = sbr.rel (0) target = $region13
    $region12: #{linear_block_forward.1} parent=1 // pred_region
      _
    $region13: #{linear_block_forward.1} parent=1 // pred_fallthru
      _
    // Predicated region
    $region14: #{linear_block_forward.1} parent=1 // pred_check
      _
    $region15: #{linear_block_forward.1} parent=1 // pred_check_branch
      %17 = sbr.rel (0) target = $region17
    $region16: #{linear_block_forward.1} parent=1 // pred_region
      _
    $region17: #{linear_block_forward.1} parent=1 // pred_fallthru
      _
    %p18 = scmp.eq.s32.totalorder 0, 0
    // Predicated region
    $region18: #{linear_block_forward.1} parent=1 // pred_check
      %p19 = pneg %p18
    $region19: #{linear_block_forward.1} parent=1 // pred_check_branch
      %21 = sbr.rel (%p19) target = $region21
    $region20: #{linear_block_forward.1} parent=1 // pred_region
      %vm22 = vcmask 523264
      %23 = vst.msk [vmem:[#allocation2] sm:$0xff] %vm22, 0.0
    $region21: #{linear_block_forward.1} parent=1 // pred_fallthru
      _
    %v24 = vld [vmem:[#allocation2] sm:$0xff]
    %v25 = vld [vmem:[%s0] sm:$0xff]
    %v26 = vld [vmem:[%s0 + $0x8] sm:$0xff]
    %v27 = vld [vmem:[%s0 + $0x10] sm:$0xff]
    %v28 = vld [vmem:[%s1] sm:$0xff]
    %v29 = vld [vmem:[%s1 + $0x8] sm:$0xff]
    %v30 = vld [vmem:[%s1 + $0x10] sm:$0xff]
    %v31 = vld [vmem:[%s1 + $0x18] sm:$0xff]
    %v32 = vld [vmem:[%s1 + $0x20] sm:$0xff]
    %v33 = vld [vmem:[%s1 + $0x28] sm:$0xff]
    %v34 = vld [vmem:[%s1 + $0x30] sm:$0xff]
    %v35 = vld [vmem:[%s1 + $0x38] sm:$0xff]
    %v36 = vld [vmem:[%s1 + $0x40] sm:$0xff]
    %v37 = vld [vmem:[%s1 + $0x48] sm:$0xff]
    %v38 = vld [vmem:[%s1 + $0x50] sm:$0xff]
    %v39 = vld [vmem:[%s1 + $0x58] sm:$0xff]
    %v40 = vld [vmem:[%s1 + $0x60] sm:$0xff]
    %v41 = vld [vmem:[%s1 + $0x68] sm:$0xff]
    %v42 = vld [vmem:[%s1 + $0x70] sm:$0xff]
    %v43 = vld [vmem:[%s1 + $0x78] sm:$0xff]
    %v44 = vld [vmem:[%s1 + $0x80] sm:$0xff]
    %v45 = vld [vmem:[%s1 + $0x88] sm:$0xff]
    %v46 = vld [vmem:[%s1 + $0x90] sm:$0xff]
    %v47 = vld [vmem:[%s1 + $0x98] sm:$0xff]
    %v48 = vld [vmem:[%s1 + $0xa0] sm:$0xff]
    %v49 = vld [vmem:[%s1 + $0xa8] sm:$0xff]
    %v50 = vld [vmem:[%s1 + $0xb0] sm:$0xff]
    %v51 = vld [vmem:[%s1 + $0xb8] sm:$0xff]
    %v52 = vld [vmem:[%s1 + $0xc0] sm:$0xff]
    %v53 = vld [vmem:[%s1 + $0xc8] sm:$0xff]
    %v54 = vld [vmem:[%s1 + $0xd0] sm:$0xff]
    %v55 = vld [vmem:[%s1 + $0xd8] sm:$0xff]
    %v56 = vld [vmem:[%s1 + $0xe0] sm:$0xff]
    %v57 = vld [vmem:[%s1 + $0xe8] sm:$0xff]
    %v58 = vld [vmem:[%s1 + $0xf0] sm:$0xff]
    %v59 = vld [vmem:[%s1 + $0xf8] sm:$0xff]
    %v60 = vld [vmem:[%s1 + $0x100] sm:$0xff]
    %v61 = vld [vmem:[%s1 + $0x108] sm:$0xff]
    %v62 = vld [vmem:[%s1 + $0x110] sm:$0xff]
    %v63 = vld [vmem:[%s1 + $0x118] sm:$0xff]
    %v64 = vld [vmem:[%s1 + $0x120] sm:$0xff]
    %v65 = vld [vmem:[%s1 + $0x128] sm:$0xff]
    %v66 = vld [vmem:[%s1 + $0x130] sm:$0xff]
    %v67 = vld [vmem:[%s1 + $0x138] sm:$0xff]
    %v68 = vld [vmem:[%s1 + $0x140] sm:$0xff]
    %v69 = vld [vmem:[%s1 + $0x148] sm:$0xff]
    %v70 = vld [vmem:[%s1 + $0x150] sm:$0xff]
    %v71 = vld [vmem:[%s1 + $0x158] sm:$0xff]
    %v72 = vld [vmem:[%s1 + $0x160] sm:$0xff]
    %v73 = vld [vmem:[%s1 + $0x168] sm:$0xff]
    %v74 = vld [vmem:[%s1 + $0x170] sm:$0xff]
    %v75 = vld [vmem:[%s1 + $0x178] sm:$0xff]
    %76 = vmatprep.subr.mxu0 0.0
    %77 = vmatpush1.msra.mxu0 %v43
    %78 = vmatprep.subr.mxu0 0.0
    %79 = vmatpush1.msra.mxu0 %v42
    %80 = vmatprep.subr.mxu0 0.0
    %81 = vmatpush1.msra.mxu0 %v41
    %82 = vmatprep.subr.mxu0 0.0
    %83 = vmatpush1.msra.mxu0 %v40
    %84 = vmatprep.subr.mxu0 0.0
    %85 = vmatpush1.msra.mxu0 %v39
    %86 = vmatprep.subr.mxu0 0.0
    %87 = vmatpush1.msra.mxu0 %v38
    %88 = vmatprep.subr.mxu0 0.0
    %89 = vmatpush1.msra.mxu0 %v37
    %90 = vmatprep.subr.mxu0 0.0
    %91 = vmatpush1.msra.mxu0 %v36
    %92 = vmatprep.subr.mxu0 0.0
    %93 = vmatpush1.msra.mxu0 %v35
    %94 = vmatprep.subr.mxu0 0.0
    %95 = vmatpush1.msra.mxu0 %v34
    %96 = vmatprep.subr.mxu0 0.0
    %97 = vmatpush1.msra.mxu0 %v33
    %98 = vmatprep.subr.mxu0 0.0
    %99 = vmatpush1.msra.mxu0 %v32
    %100 = vmatprep.subr.mxu0 0.0
    %101 = vmatpush1.msra.mxu0 %v31
    %102 = vmatprep.subr.mxu0 0.0
    %103 = vmatpush1.msra.mxu0 %v30
    %104 = vmatprep.subr.mxu0 0.0
    %105 = vmatpush1.msra.mxu0 %v29
    %106 = vmatprep.subr.mxu0 0.0
    %107 = vmatpush1.msra.mxu0 %v28
    %108 = vmatprep.subr.mxu0 0.0
    %109 = vmatpush2.msra.mxu0 %v59
    %110 = vmatprep.subr.mxu0 0.0
    %111 = vmatpush2.msra.mxu0 %v58
    %112 = vmatprep.subr.mxu0 0.0
    %113 = vmatpush2.msra.mxu0 %v57
    %114 = vmatprep.subr.mxu0 0.0
    %115 = vmatpush2.msra.mxu0 %v56
    %116 = vmatprep.subr.mxu0 0.0
    %117 = vmatpush2.msra.mxu0 %v55
    %118 = vmatprep.subr.mxu0 0.0
    %119 = vmatpush2.msra.mxu0 %v54
    %120 = vmatprep.subr.mxu0 0.0
    %121 = vmatpush2.msra.mxu0 %v53
    %122 = vmatprep.subr.mxu0 0.0
    %123 = vmatpush2.msra.mxu0 %v52
    %124 = vmatprep.subr.mxu0 0.0
    %125 = vmatpush2.msra.mxu0 %v51
    %126 = vmatprep.subr.mxu0 0.0
    %127 = vmatpush2.msra.mxu0 %v50
    %128 = vmatprep.subr.mxu0 0.0
    %129 = vmatpush2.msra.mxu0 %v49
    %130 = vmatprep.subr.mxu0 0.0
    %131 = vmatpush2.msra.mxu0 %v48
    %132 = vmatprep.subr.mxu0 0.0
    %133 = vmatpush2.msra.mxu0 %v47
    %134 = vmatprep.subr.mxu0 0.0
    %135 = vmatpush2.msra.mxu0 %v46
    %136 = vmatprep.subr.mxu0 0.0
    %137 = vmatpush2.msra.mxu0 %v45
    %138 = vmatprep.subr.mxu0 0.0
    %139 = vmatpush2.msra.mxu0 %v44
    %140 = vmatprep.mubr.f32.mxu0 %v26
    %141 = vmatmul.mubr.f32.gmra.mxu0 %v25
    %v142 = vpop.f32.mrf.mxu0
    %v143 = vadd.f32 0.0, %v142
    %v144 = vpop.f32.mrf.mxu0
    %145 = vdwg.mxu0
    %146 = vmatprep.subr.mxu0 0.0
    %147 = vmatpush1.msra.mxu0 %v75
    %148 = vmatprep.subr.mxu0 0.0
    %149 = vmatpush1.msra.mxu0 %v74
    %150 = vmatprep.subr.mxu0 0.0
    %151 = vmatpush1.msra.mxu0 %v73
    %152 = vmatprep.subr.mxu0 0.0
    %153 = vmatpush1.msra.mxu0 %v72
    %154 = vmatprep.subr.mxu0 0.0
    %155 = vmatpush1.msra.mxu0 %v71
    %156 = vmatprep.subr.mxu0 0.0
    %157 = vmatpush1.msra.mxu0 %v70
    %158 = vmatprep.subr.mxu0 0.0
    %159 = vmatpush1.msra.mxu0 %v69
    %160 = vmatprep.subr.mxu0 0.0
    %161 = vmatpush1.msra.mxu0 %v68
    %162 = vmatprep.subr.mxu0 0.0
    %163 = vmatpush1.msra.mxu0 %v67
    %164 = vmatprep.subr.mxu0 0.0
    %165 = vmatpush1.msra.mxu0 %v66
    %166 = vmatprep.subr.mxu0 0.0
    %167 = vmatpush1.msra.mxu0 %v65
    %168 = vmatprep.subr.mxu0 0.0
    %169 = vmatpush1.msra.mxu0 %v64
    %170 = vmatprep.subr.mxu0 0.0
    %171 = vmatpush1.msra.mxu0 %v63
    %172 = vmatprep.subr.mxu0 0.0
    %173 = vmatpush1.msra.mxu0 %v62
    %174 = vmatprep.subr.mxu0 0.0
    %175 = vmatpush1.msra.mxu0 %v61
    %176 = vmatprep.subr.mxu0 0.0
    %177 = vmatpush1.msra.mxu0 %v60
    %178 = vmatprep.subr.mxu0 0.0
    %179 = vmatpush2.msra.mxu0 0.0
    %180 = vmatprep.subr.mxu0 0.0
    %181 = vmatpush2.msra.mxu0 0.0
    %182 = vmatprep.subr.mxu0 0.0
    %183 = vmatpush2.msra.mxu0 0.0
    %184 = vmatprep.subr.mxu0 0.0
    %185 = vmatpush2.msra.mxu0 0.0
    %186 = vmatprep.subr.mxu0 0.0
    %187 = vmatpush2.msra.mxu0 0.0
    %188 = vmatprep.subr.mxu0 0.0
    %189 = vmatpush2.msra.mxu0 0.0
    %190 = vmatprep.subr.mxu0 0.0
    %191 = vmatpush2.msra.mxu0 0.0
    %192 = vmatprep.subr.mxu0 0.0
    %193 = vmatpush2.msra.mxu0 0.0
    %194 = vmatprep.subr.mxu0 0.0
    %195 = vmatpush2.msra.mxu0 0.0
    %196 = vmatprep.subr.mxu0 0.0
    %197 = vmatpush2.msra.mxu0 0.0
    %198 = vmatprep.subr.mxu0 0.0
    %199 = vmatpush2.msra.mxu0 0.0
    %200 = vmatprep.subr.mxu0 0.0
    %201 = vmatpush2.msra.mxu0 0.0
    %202 = vmatprep.subr.mxu0 0.0
    %203 = vmatpush2.msra.mxu0 0.0
    %204 = vmatprep.subr.mxu0 0.0
    %205 = vmatpush2.msra.mxu0 0.0
    %206 = vmatprep.subr.mxu0 0.0
    %207 = vmatpush2.msra.mxu0 0.0
    %208 = vmatprep.subr.mxu0 0.0
    %209 = vmatpush2.msra.mxu0 0.0
    %210 = vmatprep.mubr.f32.mxu0 0.0
    %211 = vmatmul.mubr.f32.gmra.mxu0 %v27
    %v212 = vpop.f32.mrf.mxu0
    %v213 = vadd.f32 %v143, %v212
    %v214 = vpop.f32.mrf.mxu0
    %215 = vdwg.mxu0
    %v216 = vadd.f32 %v24, %v213
    %vm217 = vcmask 523264
    %218 = vst.msk [vmem:[#allocation2] sm:$0xff] %vm217, %v216
    // Predicated region
    $region22: #{linear_block_forward.1} parent=1 // pred_check
      %p219 = pneg %p18
    $region23: #{linear_block_forward.1} parent=1 // pred_check_branch
      %221 = sbr.rel (%p219) target = $region25
    $region24: #{linear_block_forward.1} parent=1 // pred_region
      %v222 = vld [vmem:[#allocation2] sm:$0xff]
      %v223 = vld [vmem:[%s2] sm:$0x1]
      %v225 = vlaneseq
      %v226 = vshrl.u32 %v225, 7
      %v227 = vsub.s32 0, %v226
      %v228 = vrot.slane %v223, %v227
      %v230 = vmul.f32 %v222, %v228
      %v231 = vld [vmem:[%s3] sm:$0x1]
      %v233 = vlaneseq
      %v234 = vshrl.u32 %v233, 7
      %v235 = vsub.s32 0, %v234
      %v236 = vrot.slane %v231, %v235
      %v238 = vadd.f32 %v230, %v236
      %vm239 = vcmp.ge.f32.partialorder %v238, 0.0
      %v240 = vmul.f32 %v238, 0.2
      %v241 = vsel %vm239, %v238, %v240
      %242 = vst.msk [vmem:[#allocation3] sm:$0xff] %vm217, %v241
    $region25: #{linear_block_forward.1} parent=1 // pred_fallthru
      _
    // Predicated region
    $region26: #{linear_block_forward.1} parent=1 // pred_check
      _
    $region27: #{linear_block_forward.1} parent=1 // pred_check_branch
      %244 = sbr.rel (0) target = $region29
    $region28: #{linear_block_forward.1} parent=1 // pred_region
      %s246 = ssub.s32 128, 128
      %247 = vsyncadd [#allocation4], %s246
      %s249 = sshll.u32 [#allocation3], 4
      %s250 = int_to_ptr.vmem [resolvable:$true] %s249
      %252 = dma.vmem_to_hbm [thread:$0]  %s250, 128, %s4, [#allocation4]
    $region29: #{linear_block_forward.1} parent=1 // pred_fallthru
      _
    // Predicated region
    $region30: #{linear_block_forward.1} parent=1 // pred_check
      _
    $region31: #{linear_block_forward.1} parent=1 // pred_check_branch
      %254 = sbr.rel (0) target = $region33
    $region32: #{linear_block_forward.1} parent=1 // pred_region
      %255 = dma.done [#allocation4], 128
    $region33: #{linear_block_forward.1} parent=1 // pred_fallthru
      _
    %256 = vsyncpa [#allocation4], 1

</llo_original>
